<compile_context>
chip_gen: v5e
topology: v5e:2x2
jax: 0.10.0
libtpu: 0.0.40
codegen_flags: <defaults>
</compile_context>

<pallas_src>
import functools

import jax
import jax.numpy as jnp
from jax import lax
from jax.experimental import pallas as pl
from jax.experimental.pallas import tpu as pltpu

_LANE = 128
_MAX_BLOCK_BYTES = 1 << 20   # ~1 MiB of input per block per operand


def _is_v7x():
    try:
        return "v7" in jax.devices()[0].device_kind.lower()
    except Exception:
        return False


def _combined_loss_kernel(p_ref, t_ref, o_ref, acc_ref, *, delta, inv_n,
                          rows, block_rows):
    k = pl.program_id(1)

    @pl.when(k == 0)
    def _():
        acc_ref[...] = jnp.zeros_like(acc_ref)

    d = p_ref[...].astype(jnp.float32) - t_ref[...].astype(jnp.float32)
    ad = jnp.abs(d)
    sq = d * d
    # 0.4*d^2 + 0.3*|d| + 0.3*huber(d), constants folded per branch.
    per_elem = jnp.where(
        ad <= delta,
        0.55 * sq + 0.3 * ad,
        0.4 * sq + (0.3 + 0.3 * delta) * ad - 0.15 * delta * delta,
    )

    # Unclamped global block index of this step.  The index_map clamps the
    # DMA'd block, so out-of-range / duplicated steps re-read the last valid
    # block and must be zeroed; the last real block may also contain Pallas
    # boundary garbage beyond `rows`.
    blk = pl.program_id(0) * pl.num_programs(1) + k
    block_start = blk * block_rows
    in_range = block_start + block_rows <= rows

    def _accumulate(x):
        # vreg-exact reshape; cross-vreg VALU adds, no XLU, (8,128) result.
        acc_ref[...] += x.reshape(block_rows // 8, 8, _LANE).sum(axis=0)

    @pl.when(in_range)
    def _():                       # fast path: block fully in range, no mask
        _accumulate(per_elem)

    @pl.when(jnp.logical_not(in_range))
    def _():                       # last / duplicated block: mask stale rows
        local_ids = lax.broadcasted_iota(jnp.int32, (block_rows, _LANE), 0)
        valid = local_ids < (rows - block_start)
        _accumulate(jnp.where(valid, per_elem, 0.0))

    @pl.when(k == pl.num_programs(1) - 1)
    def _():
        o_ref[...] = acc_ref[...] * inv_n


def combined_loss(preds, targets, delta=1.0):
    """Pallas implementation of CombinedLoss.forward. Returns a scalar f32."""
    assert preds.shape == targets.shape
    n = int(preds.size)
    assert n > 0

    itemsize = jnp.dtype(preds.dtype).itemsize
    sub = max(8, 32 // itemsize)                    # sublane-packing multiple
    max_block_rows = max(
        sub, (_MAX_BLOCK_BYTES // (_LANE * itemsize)) // sub * sub)

    rows = pl.cdiv(n, _LANE)
    if n % _LANE != 0:
        # Fallback copy for odd sizes: zero-pad (padded diffs are 0 so they
        # contribute nothing); round rows up to the packing multiple so tiny
        # inputs present at least one full (sub, 128) tile.
        rows = pl.cdiv(rows, sub) * sub

    block_rows = min(max_block_rows, pl.cdiv(rows, sub) * sub)
    blocks_total = pl.cdiv(rows, block_rows)

    is_v7x = _is_v7x()
    num_parallel = 2 if (is_v7x and blocks_total > 1) else 1
    inner = pl.cdiv(blocks_total, num_parallel)
    last_block = blocks_total - 1

    def _as_2d(x):
        flat = x.reshape(-1)                        # no dtype cast
        if rows * _LANE != n:                       # copy only when padding
            flat = jnp.pad(flat, (0, rows * _LANE - n))
        return flat.reshape(rows, _LANE)

    p2 = _as_2d(preds)
    t2 = _as_2d(targets)

    # Clamp the block index so duplicated / out-of-range steps of the parallel
    # split re-read a valid block (fully masked out in-kernel).
    def in_map(p, k):
        return (jnp.minimum(p * inner + k, last_block), 0)

    def make_in_spec():
        if num_parallel == 2:                       # v7x: 3-deep buffering
            try:
                return pl.BlockSpec((block_rows, _LANE), in_map,
                                    pipeline_mode=pl.Buffered(3))
            except TypeError:
                pass
        return pl.BlockSpec((block_rows, _LANE), in_map)

    kernel = functools.partial(
        _combined_loss_kernel,
        delta=float(delta),
        inv_n=1.0 / float(n),
        rows=rows,
        block_rows=block_rows,
    )

    out = pl.pallas_call(
        kernel,
        out_shape=jax.ShapeDtypeStruct((num_parallel * 8, _LANE), jnp.float32),
        grid_spec=pltpu.PrefetchScalarGridSpec(
            num_scalar_prefetch=0,
            grid=(num_parallel, inner),
            in_specs=[make_in_spec(), make_in_spec()],
            out_specs=pl.BlockSpec((8, _LANE), lambda p, k: (p, 0)),
            scratch_shapes=[pltpu.VMEM((8, _LANE), jnp.float32)],
        ),
        compiler_params=pltpu.CompilerParams(
            dimension_semantics=("parallel", "arbitrary"),
        ),
    )(p2, t2)

    # Each partial-sum slab is already scaled by 1/N; padded, duplicated and
    # OOB rows contributed exactly 0, so the global mean is just the sum.
    return jnp.sum(out)


def _combined_loss_ref(preds, targets, delta=1.0):
    p = preds.astype(jnp.float32)
    t = targets.astype(jnp.float32)
    d = p - t
    ad = jnp.abs(d)
    mse = jnp.mean(d * d)
    mae = jnp.mean(ad)
    hub = jnp.mean(jnp.where(ad <= delta, 0.5 * d * d,
                             delta * (ad - 0.5 * delta)))
    return 0.4 * mse + 0.3 * mae + 0.3 * hub


if __name__ == "__main__":
    key = jax.random.PRNGKey(0)
    k1, k2, k3, k4 = jax.random.split(key, 4)

    # Primary test: NCHW-ish tensor (numel % 128 == 0 -> zero-copy fast path).
    shape = (2, 4, 16, 16)
    preds = jax.random.normal(k1, shape, dtype=jnp.float32)
    targets = jax.random.normal(k2, shape, dtype=jnp.float32)
    out = jax.block_until_ready(combined_loss(preds, targets, delta=1.0))
    ref = _combined_loss_ref(preds, targets, delta=1.0)
    assert jnp.allclose(out, ref, rtol=1e-5, atol=1e-6), (out, ref)

    # Secondary test: odd element count (exercises the padded / masked path).
    shape2 = (3, 5, 7)
    p2 = 2.0 * jax.random.normal(k3, shape2, dtype=jnp.float32)
    t2 = jax.random.normal(k4, shape2, dtype=jnp.float32)
    out2 = jax.block_until_ready(combined_loss(p2, t2, delta=1.0))
    ref2 = _combined_loss_ref(p2, t2, delta=1.0)
    assert jnp.allclose(out2, ref2, rtol=1e-5, atol=1e-6), (out2, ref2)

    print("KERNEL_OK")
</pallas_src>

<mosaic_0001>
module attributes {stable_mosaic.version = 11 : i64} {
  func.func @_combined_loss_kernel(%arg0: i32, %arg1: i32, %arg2: memref<16x128xf32, #tpu.memory_space<vmem>>, %arg3: memref<16x128xf32, #tpu.memory_space<vmem>>, %arg4: memref<8x128xf32, #tpu.memory_space<vmem>>, %arg5: memref<8x128xf32, #tpu.memory_space<vmem>>) attributes {dimension_semantics = [#tpu.dimension_semantics<parallel>, #tpu.dimension_semantics<arbitrary>], iteration_bounds = array<i64: 1, 1>, scalar_prefetch = 0 : i64, scratch_operands = 1 : i64, tpu.core_type = #tpu.core_type<tc>, window_params = [{transform_indices = @transform_0, window_bounds = array<i64: 16, 128>}, {transform_indices = @transform_1, window_bounds = array<i64: 16, 128>}, {transform_indices = @transform_2, window_bounds = array<i64: 8, 128>}]} {
    %c0_i32 = arith.constant 0 : i32
    %0 = arith.cmpi eq, %arg1, %c0_i32 : i32
    %1 = arith.extui %0 : i1 to i32
    %c0_i32_0 = arith.constant 0 : i32
    %2 = arith.cmpi ne, %1, %c0_i32_0 : i32
    scf.if %2 {
      %cst_15 = arith.constant 0.000000e+00 : f32
      %36 = vector.broadcast %cst_15 : f32 to vector<8x128xf32>
      %c0_16 = arith.constant 0 : index
      %c0_17 = arith.constant 0 : index
      %37 = vector.load %arg5[%c0_16, %c0_17] : memref<8x128xf32, #tpu.memory_space<vmem>>, vector<8x128xf32>
      tpu.vector_store %arg5[%c0_16, %c0_17], %36 {strides = array<i32>} : memref<8x128xf32, #tpu.memory_space<vmem>>, vector<8x128xf32>,
    } else {
    }
    %c0 = arith.constant 0 : index
    %c0_1 = arith.constant 0 : index
    %3 = vector.load %arg2[%c0, %c0_1] : memref<16x128xf32, #tpu.memory_space<vmem>>, vector<16x128xf32>
    %c0_2 = arith.constant 0 : index
    %c0_3 = arith.constant 0 : index
    %4 = vector.load %arg3[%c0_2, %c0_3] : memref<16x128xf32, #tpu.memory_space<vmem>>, vector<16x128xf32>
    %5 = arith.subf %3, %4 : vector<16x128xf32>
    %6 = math.absf %5 : vector<16x128xf32>
    %7 = arith.mulf %5, %5 : vector<16x128xf32>
    %cst = arith.constant 1.000000e+00 : f32
    %8 = vector.broadcast %cst : f32 to vector<16x128xf32>
    %9 = arith.cmpf ole, %6, %8 : vector<16x128xf32>
    %cst_4 = arith.constant 5.500000e-01 : f32
    %10 = vector.broadcast %cst_4 : f32 to vector<16x128xf32>
    %11 = arith.mulf %10, %7 : vector<16x128xf32>
    %cst_5 = arith.constant 3.000000e-01 : f32
    %12 = vector.broadcast %cst_5 : f32 to vector<16x128xf32>
    %13 = arith.mulf %12, %6 : vector<16x128xf32>
    %14 = arith.addf %11, %13 : vector<16x128xf32>
    %cst_6 = arith.constant 4.000000e-01 : f32
    %15 = vector.broadcast %cst_6 : f32 to vector<16x128xf32>
    %16 = arith.mulf %15, %7 : vector<16x128xf32>
    %cst_7 = arith.constant 6.000000e-01 : f32
    %17 = vector.broadcast %cst_7 : f32 to vector<16x128xf32>
    %18 = arith.mulf %17, %6 : vector<16x128xf32>
    %19 = arith.addf %16, %18 : vector<16x128xf32>
    %cst_8 = arith.constant 1.500000e-01 : f32
    %20 = vector.broadcast %cst_8 : f32 to vector<16x128xf32>
    %21 = arith.subf %19, %20 : vector<16x128xf32>
    %22 = arith.select %9, %14, %21 : vector<16x128xi1>, vector<16x128xf32>
    %c1_i32 = arith.constant 1 : i32
    %23 = arith.muli %arg0, %c1_i32 : i32
    %24 = arith.addi %23, %arg1 : i32
    %c16_i32 = arith.constant 16 : i32
    %25 = arith.muli %24, %c16_i32 : i32
    %c16_i32_9 = arith.constant 16 : i32
    %26 = arith.addi %25, %c16_i32_9 : i32
    %c16_i32_10 = arith.constant 16 : i32
    %27 = arith.cmpi sle, %26, %c16_i32_10 : i32
    %28 = arith.extui %27 : i1 to i32
    %c0_i32_11 = arith.constant 0 : i32
    %29 = arith.cmpi ne, %28, %c0_i32_11 : i32
    scf.if %29 {
      %c0_15 = arith.constant 0 : index
      %c0_16 = arith.constant 0 : index
      %36 = vector.load %arg5[%c0_15, %c0_16] : memref<8x128xf32, #tpu.memory_space<vmem>>, vector<8x128xf32>
      %37 = vector.shape_cast %22 : vector<16x128xf32> to vector<2x8x128xf32>
      %cst_17 = arith.constant dense<0.000000e+00> : vector<8x128xf32>
      %38 = vector.multi_reduction <add>, %37, %cst_17 [0] : vector<2x8x128xf32> to vector<8x128xf32>
      %39 = arith.addf %36, %38 : vector<8x128xf32>
      %c0_18 = arith.constant 0 : index
      %c0_19 = arith.constant 0 : index
      %40 = vector.load %arg5[%c0_18, %c0_19] : memref<8x128xf32, #tpu.memory_space<vmem>>, vector<8x128xf32>
      tpu.vector_store %arg5[%c0_18, %c0_19], %39 {strides = array<i32>} : memref<8x128xf32, #tpu.memory_space<vmem>>, vector<8x128xf32>,
    } else {
    }
    %true = arith.constant true
    %30 = arith.xori %27, %true : i1
    %31 = arith.extui %30 : i1 to i32
    %c0_i32_12 = arith.constant 0 : i32
    %32 = arith.cmpi ne, %31, %c0_i32_12 : i32
    scf.if %32 {
      %36 = tpu.iota {dimensions = array<i32: 0>} : vector<16x128xi32>
      %c16_i32_15 = arith.constant 16 : i32
      %37 = arith.subi %c16_i32_15, %25 : i32
      %38 = vector.broadcast %37 : i32 to vector<16x128xi32>
      %39 = arith.cmpi slt, %36, %38 : vector<16x128xi32>
      %cst_16 = arith.constant 0.000000e+00 : f32
      %40 = vector.broadcast %cst_16 : f32 to vector<16x128xf32>
      %41 = arith.select %39, %22, %40 : vector<16x128xi1>, vector<16x128xf32>
      %c0_17 = arith.constant 0 : index
      %c0_18 = arith.constant 0 : index
      %42 = vector.load %arg5[%c0_17, %c0_18] : memref<8x128xf32, #tpu.memory_space<vmem>>, vector<8x128xf32>
      %43 = vector.shape_cast %41 : vector<16x128xf32> to vector<2x8x128xf32>
      %cst_19 = arith.constant dense<0.000000e+00> : vector<8x128xf32>
      %44 = vector.multi_reduction <add>, %43, %cst_19 [0] : vector<2x8x128xf32> to vector<8x128xf32>
      %45 = arith.addf %42, %44 : vector<8x128xf32>
      %c0_20 = arith.constant 0 : index
      %c0_21 = arith.constant 0 : index
      %46 = vector.load %arg5[%c0_20, %c0_21] : memref<8x128xf32, #tpu.memory_space<vmem>>, vector<8x128xf32>
      tpu.vector_store %arg5[%c0_20, %c0_21], %45 {strides = array<i32>} : memref<8x128xf32, #tpu.memory_space<vmem>>, vector<8x128xf32>,
    } else {
    }
    %c0_i32_13 = arith.constant 0 : i32
    %33 = arith.cmpi eq, %arg1, %c0_i32_13 : i32
    %34 = arith.extui %33 : i1 to i32
    %c0_i32_14 = arith.constant 0 : i32
    %35 = arith.cmpi ne, %34, %c0_i32_14 : i32
    scf.if %35 {
      %c0_15 = arith.constant 0 : index
      %c0_16 = arith.constant 0 : index
      %36 = vector.load %arg5[%c0_15, %c0_16] : memref<8x128xf32, #tpu.memory_space<vmem>>, vector<8x128xf32>
      %cst_17 = arith.constant 4.8828125E-4 : f32
      %37 = vector.broadcast %cst_17 : f32 to vector<8x128xf32>
      %38 = arith.mulf %36, %37 : vector<8x128xf32>
      %c0_18 = arith.constant 0 : index
      %c0_19 = arith.constant 0 : index
      %39 = vector.load %arg4[%c0_18, %c0_19] : memref<8x128xf32, #tpu.memory_space<vmem>>, vector<8x128xf32>
      tpu.vector_store %arg4[%c0_18, %c0_19], %38 {strides = array<i32>} : memref<8x128xf32, #tpu.memory_space<vmem>>, vector<8x128xf32>,
    } else {
    }
    return
  }
  func.func @transform_0(%arg0: i32, %arg1: i32) -> (i32, i32) {
    %c1_i32 = arith.constant 1 : i32
    %0 = arith.muli %arg0, %c1_i32 : i32
    %1 = arith.addi %0, %arg1 : i32
    %c0_i32 = arith.constant 0 : i32
    %2 = arith.minsi %1, %c0_i32 : i32
    %c0_i32_0 = arith.constant 0 : i32
    %c0_i32_1 = arith.constant 0 : i32
    return %2, %c0_i32_0 : i32, i32
  }
  func.func @transform_1(%arg0: i32, %arg1: i32) -> (i32, i32) {
    %c1_i32 = arith.constant 1 : i32
    %0 = arith.muli %arg0, %c1_i32 : i32
    %1 = arith.addi %0, %arg1 : i32
    %c0_i32 = arith.constant 0 : i32
    %2 = arith.minsi %1, %c0_i32 : i32
    %c0_i32_0 = arith.constant 0 : i32
    %c0_i32_1 = arith.constant 0 : i32
    return %2, %c0_i32_0 : i32, i32
  }
  func.func @transform_2(%arg0: i32, %arg1: i32) -> (i32, i32) {
    %c0_i32 = arith.constant 0 : i32
    %c0_i32_0 = arith.constant 0 : i32
    return %arg0, %c0_i32 : i32, i32
  }
}

</mosaic_0001>

<llo_original>
// kernel: tpu_custom_call.1
$region0: #{tpu_custom_call.1}
  #allocation0 [shape = 'u32[]', space=smem, size = 0x4, offset = 0x4, fixed_abs, tag = 'smem constant byte address 0x4 - core index']
  #allocation1 [shape = 'u32[72,128]{1,0:T(1,128)}', space=vmem, size = 0x9000, scoped, tag = 'internal scratch']
  #allocation2 [shape = 'f32[8,128]{1,0:T(8,128)}', space=vmem, size = 0x1000, scoped, tag = 'scratch operand']
  %s0 = inlined_call_operand.hbm [shape: f32[16,128], index: 0, kind: input, shape index: {}]
  %s1 = inlined_call_operand.hbm [shape: f32[16,128], index: 1, kind: input, shape index: {}]
  %s2 = inlined_call_operand.hbm [shape: f32[8,128], index: 2, kind: output, shape index: {}]
  %s3 = sld [smem:[#allocation0]]
  $region42: #{tpu_custom_call.1} parent=0
    _
  %s5 = ssub.s32 1, %s3
  %s6 = scalar_select 0, %s5, %s3
  $region1: #{tpu_custom_call.1} parent=0
    #allocation3 [shape = 'u8[8192]{0}', space=vmem, size = 0x2000, scoped, tag = 'input window, operand 0, single buffered']
    #allocation4 [shape = 's32[1]{0}', space=sflag, size = 0x4, scoped, tag = 'scoped memory for tpu_custom_call.1']
    #allocation5 [shape = 's32[1]{0}', space=sflag, size = 0x4, scoped, tag = 'scoped memory for tpu_custom_call.1']
    #allocation6 [shape = 'u8[8192]{0}', space=vmem, size = 0x2000, scoped, tag = 'input window, operand 1, single buffered']
    #allocation7 [shape = 's32[1]{0}', space=sflag, size = 0x4, scoped, tag = 'scoped memory for tpu_custom_call.1']
    #allocation8 [shape = 'u8[4096]{0}', space=vmem, size = 0x1000, scoped, tag = 'output window, operand 0, single buffered']
    %7 = vsyncpa [#allocation4], 0
    %8 = vsyncpa [#allocation7], 0
    %9 = vsyncpa [#allocation5], 0
    // Predicated region
    $region2: #{tpu_custom_call.1} parent=1 // pred_check
      _
    $region3: #{tpu_custom_call.1} parent=1 // pred_check_branch
      %11 = sbr.rel (0) target = $region5
    $region4: #{tpu_custom_call.1} parent=1 // pred_region
      %s12 = sadd.s32 0, 0
      %p13 = scmp.lt.s32.totalorder %s12, 0
      %s14 = scalar_select %p13, %s12, 0
      %s15 = smul.u32 2, %s14
      %17 = vsyncadd [#allocation4], 0
      %s18 = smul.addr %s15, 8
      %s19 = scalar_lea.hbm %s0, %s18
      %s20 = sshll.u32 %s19, 4
      %s21 = int_to_ptr.hbm [resolvable:$true] %s20
      %s22 = sshll.u32 [#allocation3], 4
      %s23 = int_to_ptr.vmem [resolvable:$true] %s22
      %28 = dma.hbm_to_vmem [thread:$0]  %s21, 256, %s23, [#allocation4], 128, 128, 8
    $region5: #{tpu_custom_call.1} parent=1 // pred_fallthru
      _
    // Predicated region
    $region6: #{tpu_custom_call.1} parent=1 // pred_check
      _
    $region7: #{tpu_custom_call.1} parent=1 // pred_check_branch
      %30 = sbr.rel (0) target = $region9
    $region8: #{tpu_custom_call.1} parent=1 // pred_region
      %s31 = sadd.s32 0, 0
      %p32 = scmp.lt.s32.totalorder %s31, 0
      %s33 = scalar_select %p32, %s31, 0
      %s34 = smul.u32 2, %s33
      %36 = vsyncadd [#allocation7], 0
      %s37 = smul.addr %s34, 8
      %s38 = scalar_lea.hbm %s1, %s37
      %s39 = sshll.u32 %s38, 4
      %s40 = int_to_ptr.hbm [resolvable:$true] %s39
      %s41 = sshll.u32 [#allocation6], 4
      %s42 = int_to_ptr.vmem [resolvable:$true] %s41
      %47 = dma.hbm_to_vmem [thread:$0]  %s40, 256, %s42, [#allocation7], 128, 128, 8
    $region9: #{tpu_custom_call.1} parent=1 // pred_fallthru
      _
    // Predicated region
    $region10: #{tpu_custom_call.1} parent=1 // pred_check
      _
    $region11: #{tpu_custom_call.1} parent=1 // pred_check_branch
      %49 = sbr.rel (0) target = $region13
    $region12: #{tpu_custom_call.1} parent=1 // pred_region
      %51 = dma.done [#allocation4], 256
    $region13: #{tpu_custom_call.1} parent=1 // pred_fallthru
      _
    // Predicated region
    $region14: #{tpu_custom_call.1} parent=1 // pred_check
      _
    $region15: #{tpu_custom_call.1} parent=1 // pred_check_branch
      %53 = sbr.rel (0) target = $region17
    $region16: #{tpu_custom_call.1} parent=1 // pred_region
      %55 = dma.done [#allocation7], 256
    $region17: #{tpu_custom_call.1} parent=1 // pred_fallthru
      _
    %s56 = sadd.s32 0, 0
    %p57 = scmp.lt.s32.totalorder %s56, 0
    %s58 = scalar_select %p57, %s56, 0
    %s59 = smul.u32 2, %s58
    %s60 = sadd.s32 0, 0
    %p61 = scmp.lt.s32.totalorder %s60, 0
    %s62 = scalar_select %p61, %s60, 0
    %s63 = smul.u32 2, %s62
    %p64 = scmp.eq.s32.totalorder 0, 0
    // Predicated region
    $region18: #{tpu_custom_call.1} parent=1 // pred_check
      %p65 = pneg %p64
    $region19: #{tpu_custom_call.1} parent=1 // pred_check_branch
      %67 = sbr.rel (%p65) target = $region21
    $region20: #{tpu_custom_call.1} parent=1 // pred_region
      %68 = vst [vmem:[#allocation2] sm:$0xff] 0.0
    $region21: #{tpu_custom_call.1} parent=1 // pred_fallthru
      _
    %v69 = vld [vmem:[#allocation3] sm:$0xff]
    %v70 = vld [vmem:[#allocation3 + $0x8] sm:$0xff]
    %v71 = vld [vmem:[#allocation6] sm:$0xff]
    %v72 = vld [vmem:[#allocation6 + $0x8] sm:$0xff]
    %v73 = vsub.f32 %v69, %v71
    %v74 = vsub.f32 %v70, %v72
    %v75 = vand.u32 2147483647, %v73
    %v76 = vand.u32 2147483647, %v74
    %v77 = vmul.f32 %v73, %v73
    %v78 = vmul.f32 %v74, %v74
    %vm79 = vcmp.le.f32.partialorder %v75, 1.0
    %vm80 = vcmp.le.f32.partialorder %v76, 1.0
    %v81 = vmul.f32 %v77, 0.55
    %v82 = vmul.f32 %v78, 0.55
    %v83 = vmul.f32 %v75, 0.3
    %v84 = vmul.f32 %v76, 0.3
    %v85 = vadd.f32 %v81, %v83
    %v86 = vadd.f32 %v82, %v84
    %v87 = vmul.f32 %v77, 0.4
    %v88 = vmul.f32 %v78, 0.4
    %v89 = vmul.f32 %v75, 0.6
    %v90 = vmul.f32 %v76, 0.6
    %v91 = vadd.f32 %v87, %v89
    %v92 = vadd.f32 %v88, %v90
    %v93 = vsub.f32 %v91, 0.15
    %v94 = vsub.f32 %v92, 0.15
    %v95 = vsel %vm79, %v85, %v93
    %v96 = vsel %vm80, %v86, %v94
    %s97 = sadd.s32 0, 0
    %s98 = smul.u32 %s97, 16
    %s99 = sadd.s32 %s98, 16
    %p100 = scmp.le.s32.totalorder %s99, 16
    // Predicated region
    $region22: #{tpu_custom_call.1} parent=1 // pred_check
      %p101 = pneg %p100
    $region23: #{tpu_custom_call.1} parent=1 // pred_check_branch
      %103 = sbr.rel (%p101) target = $region25
    $region24: #{tpu_custom_call.1} parent=1 // pred_region
      %v104 = vld [vmem:[#allocation2] sm:$0xff]
      %v105 = vadd.f32 %v95, %v96
      %v106 = vadd.f32 %v104, %v105
      %107 = vst [vmem:[#allocation2] sm:$0xff] %v106
    $region25: #{tpu_custom_call.1} parent=1 // pred_fallthru
      _
    %p108 = scmp.gt.s32.totalorder %s99, 16
    // Predicated region
    $region26: #{tpu_custom_call.1} parent=1 // pred_check
      %p109 = pneg %p108
    $region27: #{tpu_custom_call.1} parent=1 // pred_check_branch
      %111 = sbr.rel (%p109) target = $region29
    $region28: #{tpu_custom_call.1} parent=1 // pred_region
      %v112 = vlaneseq
      %v113 = vshrl.u32 %v112, 7
      %v114 = vadd.s32 %v113, 8
      %s115 = ssub.s32 16, %s98
      %v116 = vstv %s115
      %vm117 = vcmp.lt.s32.totalorder %v113, %v116
      %vm118 = vcmp.lt.s32.totalorder %v114, %v116
      %v119 = vsel %vm117, %v95, 0.0
      %v120 = vsel %vm118, %v96, 0.0
      %v121 = vld [vmem:[#allocation2] sm:$0xff]
      %v122 = vadd.f32 %v119, %v120
      %v123 = vadd.f32 %v121, %v122
      %124 = vst [vmem:[#allocation2] sm:$0xff] %v123
    $region29: #{tpu_custom_call.1} parent=1 // pred_fallthru
      _
    // Predicated region
    $region30: #{tpu_custom_call.1} parent=1 // pred_check
      %p125 = pneg %p64
    $region31: #{tpu_custom_call.1} parent=1 // pred_check_branch
      %127 = sbr.rel (%p125) target = $region33
    $region32: #{tpu_custom_call.1} parent=1 // pred_region
      %v128 = vld [vmem:[#allocation2] sm:$0xff]
      %v129 = vmul.f32 %v128, 0.00048828125
      %130 = vst [vmem:[#allocation8] sm:$0xff] %v129
    $region33: #{tpu_custom_call.1} parent=1 // pred_fallthru
      _
    // Predicated region
    $region34: #{tpu_custom_call.1} parent=1 // pred_check
      _
    $region35: #{tpu_custom_call.1} parent=1 // pred_check_branch
      %132 = sbr.rel (0) target = $region37
    $region36: #{tpu_custom_call.1} parent=1 // pred_region
      %134 = vsyncadd [#allocation5], 0
      %s136 = sshll.u32 [#allocation8], 4
      %s137 = int_to_ptr.vmem [resolvable:$true] %s136
      %s138 = sshll.u32 %s2, 4
      %s139 = int_to_ptr.hbm [resolvable:$true] %s138
      %141 = dma.vmem_to_hbm [thread:$0]  %s137, 128, %s139, [#allocation5]
    $region37: #{tpu_custom_call.1} parent=1 // pred_fallthru
      _
    // Predicated region
    $region38: #{tpu_custom_call.1} parent=1 // pred_check
      _
    $region39: #{tpu_custom_call.1} parent=1 // pred_check_branch
      %143 = sbr.rel (0) target = $region41
    $region40: #{tpu_custom_call.1} parent=1 // pred_region
      %145 = dma.done [#allocation5], 128
    $region41: #{tpu_custom_call.1} parent=1 // pred_fallthru
      _
    %146 = vsyncpa [#allocation4], 1
    %147 = vsyncpa [#allocation7], 1
    %148 = vsyncpa [#allocation5], 1

</llo_original>
